<compile_context>
chip_gen: v7x
topology: tpu7x:2x2x1
jax: 0.10.0
libtpu: 0.0.40
codegen_flags: <defaults>
</compile_context>

<pallas_src>
import functools
import math

import jax
import jax.numpy as jnp
from jax.experimental import pallas as pl
from jax.experimental.pallas import tpu as pltpu


def _round_up(x, m):
    return ((x + m - 1) // m) * m


# ----------------------------------------------------------------------------- kernel

def _center_intersection_kernel(emb_ref, w1_ref, b1_ref, w2_ref, b2_ref, out_ref,
                                *, approx_recip):
    bt, n, d = emb_ref.shape
    emb = emb_ref[...]                                  # (Bt, N, D) — load once, reuse

    # Stack the batch into the MXU M dimension for both matmuls.
    x = emb.reshape(bt * n, d)                          # (Bt*N, D)

    h = jnp.dot(x, w1_ref[...], preferred_element_type=jnp.float32)
    h = jnp.maximum(h + b1_ref[...], 0.0)               # bias + ReLU in f32

    logits = jnp.dot(h.astype(w2_ref.dtype), w2_ref[...],
                     preferred_element_type=jnp.float32)
    logits = (logits + b2_ref[...]).reshape(bt, n, d)   # back to per-instance layout

    # Numerically-stable softmax over each instance's own N rows (axis=1 only).
    m = jnp.max(logits, axis=1, keepdims=True)          # (Bt, 1, D)
    e = jnp.exp(logits - m)                              # (Bt, N, D)
    inv = pl.reciprocal(jnp.sum(e, axis=1, keepdims=True), approx=approx_recip)
    att = e * inv                                        # (Bt, N, D), f32

    # Weighted sum over N, accumulate in f32; lane-dense (Bt, D_pad) store.
    out_ref[...] = jnp.sum(att * emb.astype(jnp.float32), axis=1)


# ----------------------------------------------------------------------------- params

def prepare_params(w1_out_in, b1, w2_out_in, b2, *, compute_dtype=jnp.float32):
    """Transpose PyTorch (out,in) weights to (in,out), pad dim to a multiple of
    128 and store in the target compute dtype ONCE (no per-call casts)."""
    d = int(w1_out_in.shape[0])
    d_pad = _round_up(max(d, 128), 128)

    def pad_w(w_oi):
        w = jnp.asarray(w_oi).T.astype(compute_dtype)            # (in, out)
        if d_pad != d:
            w = jnp.zeros((d_pad, d_pad), compute_dtype).at[:d, :d].set(w)
        return w

    def pad_b(b):
        b = jnp.asarray(b).astype(jnp.float32).reshape(1, d)     # biases stay f32
        if d_pad != d:
            b = jnp.zeros((1, d_pad), jnp.float32).at[:, :d].set(b)
        return b

    return dict(w1=pad_w(w1_out_in), b1=pad_b(b1),
                w2=pad_w(w2_out_in), b2=pad_b(b2),
                dim=d, d_pad=d_pad, compute_dtype=compute_dtype)


# ----------------------------------------------------------------------------- wrappers

def center_intersection_batched(embeddings, params, *, approx_recip=True,
                                b_tile=None, vmem_budget_bytes=12 << 20):
    """embeddings: (B, N, dim). Returns (B, dim) f32."""
    w1, b1, w2, b2 = params["w1"], params["b1"], params["w2"], params["b2"]
    dim, d_pad, cdt = params["dim"], params["d_pad"], params["compute_dtype"]

    B, N, D = embeddings.shape
    assert D == dim, (D, dim)
    if embeddings.dtype != cdt:
        embeddings = embeddings.astype(cdt)  # prefer storing embeddings in cdt upstream

    itemsize = jnp.dtype(cdt).itemsize
    if b_tile is None:
        # Size the batch tile against VMEM. Per batch element:
        #   - double-buffered input block  : 2 * N * D_pad * itemsize
        #   - f32 intermediates (h, logits/exp, att + headroom): ~4 * N * D_pad * 4
        #   - double-buffered output block : 2 * D_pad * 4
        # The VMEM-resident weights/biases are subtracted from the budget.
        resident = 2 * d_pad * d_pad * itemsize + 2 * d_pad * 4
        budget = max(vmem_budget_bytes - resident, 1 << 20)
        per_b = 2 * N * d_pad * itemsize + 4 * N * d_pad * 4 + 2 * d_pad * 4
        b_tile = int(min(256, max(8, budget // per_b)))
    b_tile = min(b_tile, _round_up(B, 8))
    b_tile = max(8, (b_tile // 8) * 8)          # sublane-aligned output blocks
    b_pad = _round_up(B, b_tile)

    emb_p = embeddings
    if (b_pad, d_pad) != (B, D):
        # Zero padding is exact: padded lanes/instances contribute 0 and are sliced off.
        emb_p = jnp.pad(embeddings, ((0, b_pad - B), (0, 0), (0, d_pad - D)))

    grid = (b_pad // b_tile,)
    const2 = lambda i: (0, 0)                   # weights/biases VMEM-resident
    kernel = functools.partial(_center_intersection_kernel, approx_recip=approx_recip)

    cost = pl.CostEstimate(
        flops=4 * b_pad * N * d_pad * d_pad,                       # two matmuls
        transcendentals=b_pad * N * d_pad,                         # exp
        bytes_accessed=(b_pad * N * d_pad * itemsize               # embeddings in
                        + 2 * d_pad * d_pad * itemsize             # W1, W2
                        + 2 * d_pad * 4                            # biases
                        + b_pad * d_pad * 4),                      # output
    )

    out = pl.pallas_call(
        kernel,
        out_shape=jax.ShapeDtypeStruct((b_pad, d_pad), jnp.float32),
        grid_spec=pltpu.PrefetchScalarGridSpec(
            num_scalar_prefetch=0,
            grid=grid,
            in_specs=[
                pl.BlockSpec((b_tile, N, d_pad), lambda i: (i, 0, 0)),  # embeddings
                pl.BlockSpec((d_pad, d_pad), const2),                   # W1 (resident)
                pl.BlockSpec((1, d_pad), const2),                       # b1 (resident)
                pl.BlockSpec((d_pad, d_pad), const2),                   # W2 (resident)
                pl.BlockSpec((1, d_pad), const2),                       # b2 (resident)
            ],
            out_specs=pl.BlockSpec((b_tile, d_pad), lambda i: (i, 0)),
        ),
        compiler_params=pltpu.CompilerParams(
            dimension_semantics=("parallel",)),   # megacore on v7x, no-op on v5e/v6e
        cost_estimate=cost,
    )(emb_p, w1, b1, w2, b2)

    if (b_pad, d_pad) != (B, D):
        out = out[:B, :D]
    return out


def center_intersection(embeddings, params, **kw):
    """Single instance, matches the nn.Module forward: embeddings (N, dim) -> (dim,)."""
    return center_intersection_batched(embeddings[None], params, **kw)[0]


# ----------------------------------------------------------------------------- reference / init

def reference(embeddings, w1_out_in, b1, w2_out_in, b2):
    """Pure-JAX reference, PyTorch layout weights (out, in). Works for (N,D) or (B,N,D)."""
    h = jax.nn.relu(embeddings @ w1_out_in.T + b1)
    att = jax.nn.softmax(h @ w2_out_in.T + b2, axis=-2)   # softmax over the N axis
    return jnp.sum(att * embeddings, axis=-2)


def _xavier_uniform(key, fan_in, fan_out):
    # matches nn.init.xavier_uniform_ (gain=1) for a (fan_out, fan_in) weight
    bound = math.sqrt(6.0 / (fan_in + fan_out))
    return jax.random.uniform(key, (fan_out, fan_in), jnp.float32, -bound, bound)


def _linear_bias(key, fan_in, dim):
    # nn.Linear default bias init: U(-1/sqrt(fan_in), 1/sqrt(fan_in))
    bound = 1.0 / math.sqrt(fan_in)
    return jax.random.uniform(key, (dim,), jnp.float32, -bound, bound)


# ----------------------------------------------------------------------------- demo / test

if __name__ == "__main__":
    # Small deterministic shapes: a batch of intersections plus one bare instance.
    B, N, DIM = 8, 4, 64   # dim=64 is padded to 128 lanes internally

    key = jax.random.PRNGKey(0)
    k_emb, k_w1, k_b1, k_w2, k_b2, k_emb2 = jax.random.split(key, 6)

    emb = jax.random.normal(k_emb, (B, N, DIM), jnp.float32)
    w1 = _xavier_uniform(k_w1, DIM, DIM)    # PyTorch layout (out, in)
    w2 = _xavier_uniform(k_w2, DIM, DIM)
    b1 = _linear_bias(k_b1, DIM, DIM)
    b2 = _linear_bias(k_b2, DIM, DIM)

    ref = reference(emb, w1, b1, w2, b2)

    # f32 path, exact reciprocal
    p32 = prepare_params(w1, b1, w2, b2, compute_dtype=jnp.float32)
    out = jax.block_until_ready(
        center_intersection_batched(emb, p32, approx_recip=False))
    assert out.shape == (B, DIM)
    assert jnp.allclose(out, ref, atol=1e-4, rtol=1e-4)

    # f32 path, EUP approximate reciprocal (default fast path)
    out_a = jax.block_until_ready(center_intersection_batched(emb, p32))
    assert jnp.allclose(out_a, ref, atol=5e-3, rtol=5e-3)

    # bf16 MXU path (embeddings + weights bf16, f32 softmax/accumulate)
    pbf = prepare_params(w1, b1, w2, b2, compute_dtype=jnp.bfloat16)
    out_bf = jax.block_until_ready(
        center_intersection_batched(emb.astype(jnp.bfloat16), pbf))
    assert jnp.allclose(out_bf, ref, atol=1.5e-1, rtol=5e-2)

    # Single instance with a non-multiple-of-128 dim (padded internally) — the
    # exact nn.Module forward: (N, dim) -> (dim,)
    N2, D2 = 3, 32
    emb2 = jax.random.normal(k_emb2, (N2, D2), jnp.float32)
    w1s = _xavier_uniform(k_w1, D2, D2)
    w2s = _xavier_uniform(k_w2, D2, D2)
    b1s = _linear_bias(k_b1, D2, D2)
    b2s = _linear_bias(k_b2, D2, D2)
    ps = prepare_params(w1s, b1s, w2s, b2s)
    out1 = jax.block_until_ready(
        center_intersection(emb2, ps, approx_recip=False))
    ref1 = reference(emb2, w1s, b1s, w2s, b2s)
    assert out1.shape == (D2,)
    assert jnp.allclose(out1, ref1, atol=1e-4, rtol=1e-4)

    print("KERNEL_OK")
</pallas_src>

<mosaic_0001>
module attributes {stable_mosaic.version = 11 : i64} {
  func.func @_center_intersection_kernel(%arg0: i32, %arg1: memref<8x4x128xf32, #tpu.memory_space<vmem>>, %arg2: memref<128x128xf32, #tpu.memory_space<vmem>>, %arg3: memref<1x128xf32, #tpu.memory_space<vmem>>, %arg4: memref<128x128xf32, #tpu.memory_space<vmem>>, %arg5: memref<1x128xf32, #tpu.memory_space<vmem>>, %arg6: memref<8x128xf32, #tpu.memory_space<vmem>>) attributes {dimension_semantics = [#tpu.dimension_semantics<parallel>], iteration_bounds = array<i64: 1>, scalar_prefetch = 0 : i64, scratch_operands = 0 : i64, tpu.core_type = #tpu.core_type<tc>, window_params = [{transform_indices = @transform_0, window_bounds = array<i64: 8, 4, 128>}, {pipeline_mode = #tpu.pipeline_mode<synchronous>, transform_indices = @transform_1, window_bounds = array<i64: 128, 128>}, {pipeline_mode = #tpu.pipeline_mode<synchronous>, transform_indices = @transform_2, window_bounds = array<i64: 1, 128>}, {pipeline_mode = #tpu.pipeline_mode<synchronous>, transform_indices = @transform_3, window_bounds = array<i64: 128, 128>}, {pipeline_mode = #tpu.pipeline_mode<synchronous>, transform_indices = @transform_4, window_bounds = array<i64: 1, 128>}, {transform_indices = @transform_5, window_bounds = array<i64: 8, 128>}]} {
    %c0 = arith.constant 0 : index
    %c0_0 = arith.constant 0 : index
    %c0_1 = arith.constant 0 : index
    %0 = vector.load %arg1[%c0, %c0_0, %c0_1] : memref<8x4x128xf32, #tpu.memory_space<vmem>>, vector<8x4x128xf32>
    %1 = vector.shape_cast %0 : vector<8x4x128xf32> to vector<32x128xf32>
    %c0_2 = arith.constant 0 : index
    %c0_3 = arith.constant 0 : index
    %2 = vector.load %arg2[%c0_2, %c0_3] : memref<128x128xf32, #tpu.memory_space<vmem>>, vector<128x128xf32>
    %cst = arith.constant dense<0.000000e+00> : vector<32x128xf32>
    %3 = tpu.matmul %1, %2, %cst {dimension_numbers = #tpu.dot_dimension_numbers<[1], [0], [0], [1], [0, 0, 1, 1], [], []>} : vector<32x128xf32>, vector<128x128xf32>, vector<32x128xf32> -> vector<32x128xf32>
    %c0_4 = arith.constant 0 : index
    %c0_5 = arith.constant 0 : index
    %4 = vector.load %arg3[%c0_4, %c0_5] : memref<1x128xf32, #tpu.memory_space<vmem>>, vector<1x128xf32>
    %5 = vector.broadcast %4 : vector<1x128xf32> to vector<32x128xf32>
    %6 = arith.addf %3, %5 : vector<32x128xf32>
    %cst_6 = arith.constant 0.000000e+00 : f32
    %7 = vector.broadcast %cst_6 : f32 to vector<32x128xf32>
    %8 = arith.maximumf %6, %7 : vector<32x128xf32>
    %c0_7 = arith.constant 0 : index
    %c0_8 = arith.constant 0 : index
    %9 = vector.load %arg4[%c0_7, %c0_8] : memref<128x128xf32, #tpu.memory_space<vmem>>, vector<128x128xf32>
    %cst_9 = arith.constant dense<0.000000e+00> : vector<32x128xf32>
    %10 = tpu.matmul %8, %9, %cst_9 {dimension_numbers = #tpu.dot_dimension_numbers<[1], [0], [0], [1], [0, 0, 1, 1], [], []>} : vector<32x128xf32>, vector<128x128xf32>, vector<32x128xf32> -> vector<32x128xf32>
    %c0_10 = arith.constant 0 : index
    %c0_11 = arith.constant 0 : index
    %11 = vector.load %arg5[%c0_10, %c0_11] : memref<1x128xf32, #tpu.memory_space<vmem>>, vector<1x128xf32>
    %12 = vector.broadcast %11 : vector<1x128xf32> to vector<32x128xf32>
    %13 = arith.addf %10, %12 : vector<32x128xf32>
    %14 = vector.shape_cast %13 : vector<32x128xf32> to vector<8x4x128xf32>
    %cst_12 = arith.constant dense<0xFF800000> : vector<8x128xf32>
    %15 = vector.multi_reduction <maximumf>, %14, %cst_12 [1] : vector<8x4x128xf32> to vector<8x128xf32>
    %16 = vector.shape_cast %15 : vector<8x128xf32> to vector<8x1x128xf32>
    %17 = vector.broadcast %16 : vector<8x1x128xf32> to vector<8x4x128xf32>
    %18 = arith.subf %14, %17 : vector<8x4x128xf32>
    %19 = math.exp %18 : vector<8x4x128xf32>
    %cst_13 = arith.constant dense<0.000000e+00> : vector<8x128xf32>
    %20 = vector.multi_reduction <add>, %19, %cst_13 [1] : vector<8x4x128xf32> to vector<8x128xf32>
    %21 = vector.shape_cast %20 : vector<8x128xf32> to vector<8x1x128xf32>
    %22 = tpu.reciprocal %21 : vector<8x1x128xf32> -> vector<8x1x128xf32>
    %23 = vector.broadcast %22 : vector<8x1x128xf32> to vector<8x4x128xf32>
    %24 = arith.mulf %19, %23 : vector<8x4x128xf32>
    %25 = arith.mulf %24, %0 : vector<8x4x128xf32>
    %cst_14 = arith.constant dense<0.000000e+00> : vector<8x128xf32>
    %26 = vector.multi_reduction <add>, %25, %cst_14 [1] : vector<8x4x128xf32> to vector<8x128xf32>
    %c0_15 = arith.constant 0 : index
    %c0_16 = arith.constant 0 : index
    %27 = vector.load %arg6[%c0_15, %c0_16] : memref<8x128xf32, #tpu.memory_space<vmem>>, vector<8x128xf32>
    tpu.vector_store %arg6[%c0_15, %c0_16], %26 {strides = array<i32>} : memref<8x128xf32, #tpu.memory_space<vmem>>, vector<8x128xf32>,
    return
  }
  func.func @transform_0(%arg0: i32) -> (i32, i32, i32) {
    %c0_i32 = arith.constant 0 : i32
    %c0_i32_0 = arith.constant 0 : i32
    %c0_i32_1 = arith.constant 0 : i32
    return %arg0, %c0_i32, %c0_i32_0 : i32, i32, i32
  }
  func.func @transform_1(%arg0: i32) -> (i32, i32) {
    %c0_i32 = arith.constant 0 : i32
    %c0_i32_0 = arith.constant 0 : i32
    %c0_i32_1 = arith.constant 0 : i32
    return %c0_i32, %c0_i32_0 : i32, i32
  }
  func.func @transform_2(%arg0: i32) -> (i32, i32) {
    %c0_i32 = arith.constant 0 : i32
    %c0_i32_0 = arith.constant 0 : i32
    %c0_i32_1 = arith.constant 0 : i32
    return %c0_i32, %c0_i32_0 : i32, i32
  }
  func.func @transform_3(%arg0: i32) -> (i32, i32) {
    %c0_i32 = arith.constant 0 : i32
    %c0_i32_0 = arith.constant 0 : i32
    %c0_i32_1 = arith.constant 0 : i32
    return %c0_i32, %c0_i32_0 : i32, i32
  }
  func.func @transform_4(%arg0: i32) -> (i32, i32) {
    %c0_i32 = arith.constant 0 : i32
    %c0_i32_0 = arith.constant 0 : i32
    %c0_i32_1 = arith.constant 0 : i32
    return %c0_i32, %c0_i32_0 : i32, i32
  }
  func.func @transform_5(%arg0: i32) -> (i32, i32) {
    %c0_i32 = arith.constant 0 : i32
    %c0_i32_0 = arith.constant 0 : i32
    return %arg0, %c0_i32 : i32, i32
  }
}

</mosaic_0001>

<llo_original>
// kernel: tpu_custom_call.1
$region0: #{tpu_custom_call.1}
  #allocation0 [shape = 'u32[]', space=smem, size = 0x4, offset = 0x4, fixed_abs, tag = 'smem constant byte address 0x4 - core index']
  #allocation1 [shape = 'u32[144,128]{1,0:T(1,128)}', space=vmem, size = 0x12000, scoped, tag = 'internal scratch']
  %s0 = inlined_call_operand.hbm [shape: f32[8,4,128], index: 0, kind: input, shape index: {}]
  %s1 = inlined_call_operand.hbm [shape: f32[128,128], index: 1, kind: input, shape index: {}]
  %s2 = inlined_call_operand.vmem [shape: f32[1,128], index: 2, kind: input, shape index: {}]
  %s3 = inlined_call_operand.hbm [shape: f32[128,128], index: 3, kind: input, shape index: {}]
  %s4 = inlined_call_operand.vmem [shape: f32[1,128], index: 4, kind: input, shape index: {}]
  %s5 = inlined_call_operand.hbm [shape: f32[8,128], index: 5, kind: output, shape index: {}]
  %s6 = sld [smem:[#allocation0]]
  $region42: #{tpu_custom_call.1} parent=0
    _
  %s8 = ssub.s32 1, %s6
  %s9 = scalar_select 0, %s8, %s6
  $region1: #{tpu_custom_call.1} parent=0
    #allocation2 [shape = 'u8[16384]{0}', space=vmem, size = 0x4000, scoped, tag = 'input window, operand 0, single buffered']
    #allocation3 [shape = 's32[1]{0}', space=sflag, size = 0x4, scoped, tag = 'scoped memory for tpu_custom_call.1']
    #allocation4 [shape = 's32[1]{0}', space=sflag, size = 0x4, scoped, tag = 'scoped memory for tpu_custom_call.1']
    #allocation5 [shape = 'u8[65536]{0}', space=vmem, size = 0x10000, scoped, tag = 'input window, operand 1, single buffered']
    #allocation6 [shape = 's32[1]{0}', space=sflag, size = 0x4, scoped, tag = 'scoped memory for tpu_custom_call.1']
    #allocation7 [shape = 'u8[65536]{0}', space=vmem, size = 0x10000, scoped, tag = 'input window, operand 3, single buffered']
    #allocation8 [shape = 'u8[4096]{0}', space=vmem, size = 0x1000, scoped, tag = 'output window, operand 0, single buffered']
    %10 = vsyncpa [#allocation3], 0
    %11 = vsyncpa [#allocation6], 0
    %12 = vsyncpa [#allocation4], 0
    // Predicated region
    $region2: #{tpu_custom_call.1} parent=1 // pred_check
      _
    $region3: #{tpu_custom_call.1} parent=1 // pred_check_branch
      %14 = sbr.rel (0) target = $region5
    $region4: #{tpu_custom_call.1} parent=1 // pred_region
      %s16 = ssub.s32 512, 512
      %17 = vsyncadd [#allocation3], %s16
      %s18 = sshll.u32 [#allocation2], 4
      %s19 = int_to_ptr.vmem [resolvable:$true] %s18
      %24 = dma.hbm_to_vmem [thread:$0]  %s0, 512, %s19, [#allocation3], 64, 64, 4
    $region5: #{tpu_custom_call.1} parent=1 // pred_fallthru
      _
    // Predicated region
    $region6: #{tpu_custom_call.1} parent=1 // pred_check
      _
    $region7: #{tpu_custom_call.1} parent=1 // pred_check_branch
      %26 = sbr.rel (0) target = $region9
    $region8: #{tpu_custom_call.1} parent=1 // pred_region
      %s28 = ssub.s32 2048, 2048
      %29 = vsyncadd [#allocation6], %s28
      %s30 = sshll.u32 [#allocation5], 4
      %s31 = int_to_ptr.vmem [resolvable:$true] %s30
      %36 = dma.hbm_to_vmem [thread:$0]  %s1, 2048, %s31, [#allocation6], 128, 128, 8
    $region9: #{tpu_custom_call.1} parent=1 // pred_fallthru
      _
    // Predicated region
    $region10: #{tpu_custom_call.1} parent=1 // pred_check
      _
    $region11: #{tpu_custom_call.1} parent=1 // pred_check_branch
      %38 = sbr.rel (0) target = $region13
    $region12: #{tpu_custom_call.1} parent=1 // pred_region
      _
    $region13: #{tpu_custom_call.1} parent=1 // pred_fallthru
      _
    // Predicated region
    $region14: #{tpu_custom_call.1} parent=1 // pred_check
      _
    $region15: #{tpu_custom_call.1} parent=1 // pred_check_branch
      %40 = sbr.rel (0) target = $region17
    $region16: #{tpu_custom_call.1} parent=1 // pred_region
      %s42 = ssub.s32 2048, 2048
      %43 = vsyncadd [#allocation6], %s42
      %s44 = sshll.u32 [#allocation7], 4
      %s45 = int_to_ptr.vmem [resolvable:$true] %s44
      %50 = dma.hbm_to_vmem [thread:$0]  %s3, 2048, %s45, [#allocation6], 128, 128, 8
    $region17: #{tpu_custom_call.1} parent=1 // pred_fallthru
      _
    // Predicated region
    $region18: #{tpu_custom_call.1} parent=1 // pred_check
      _
    $region19: #{tpu_custom_call.1} parent=1 // pred_check_branch
      %52 = sbr.rel (0) target = $region21
    $region20: #{tpu_custom_call.1} parent=1 // pred_region
      _
    $region21: #{tpu_custom_call.1} parent=1 // pred_fallthru
      _
    // Predicated region
    $region22: #{tpu_custom_call.1} parent=1 // pred_check
      _
    $region23: #{tpu_custom_call.1} parent=1 // pred_check_branch
      %54 = sbr.rel (0) target = $region25
    $region24: #{tpu_custom_call.1} parent=1 // pred_region
      %55 = dma.done [#allocation3], 512
    $region25: #{tpu_custom_call.1} parent=1 // pred_fallthru
      _
    // Predicated region
    $region26: #{tpu_custom_call.1} parent=1 // pred_check
      _
    $region27: #{tpu_custom_call.1} parent=1 // pred_check_branch
      %57 = sbr.rel (0) target = $region29
    $region28: #{tpu_custom_call.1} parent=1 // pred_region
      %58 = dma.done [#allocation6], 2048
    $region29: #{tpu_custom_call.1} parent=1 // pred_fallthru
      _
    // Predicated region
    $region30: #{tpu_custom_call.1} parent=1 // pred_check
      _
    $region31: #{tpu_custom_call.1} parent=1 // pred_check_branch
      %60 = sbr.rel (0) target = $region33
    $region32: #{tpu_custom_call.1} parent=1 // pred_region
      %61 = dma.done [#allocation6], 2048
    $region33: #{tpu_custom_call.1} parent=1 // pred_fallthru
      _
    %v62 = vld [vmem:[#allocation2] sm:$0xf]
    %v63 = vld [vmem:[#allocation2 + $0x4] sm:$0xf]
    %v64 = vld [vmem:[#allocation2 + $0x8] sm:$0xf]
    %v65 = vld [vmem:[#allocation2 + $0xc] sm:$0xf]
    %v66 = vld [vmem:[#allocation2 + $0x10] sm:$0xf]
    %v67 = vld [vmem:[#allocation2 + $0x14] sm:$0xf]
    %v68 = vld [vmem:[#allocation2 + $0x18] sm:$0xf]
    %v69 = vld [vmem:[#allocation2 + $0x1c] sm:$0xf]
    %v70 = vld [vmem:[#allocation5] sm:$0xff]
    %v71 = vld [vmem:[#allocation5 + $0x8] sm:$0xff]
    %v72 = vld [vmem:[#allocation5 + $0x10] sm:$0xff]
    %v73 = vld [vmem:[#allocation5 + $0x18] sm:$0xff]
    %v74 = vld [vmem:[#allocation5 + $0x20] sm:$0xff]
    %v75 = vld [vmem:[#allocation5 + $0x28] sm:$0xff]
    %v76 = vld [vmem:[#allocation5 + $0x30] sm:$0xff]
    %v77 = vld [vmem:[#allocation5 + $0x38] sm:$0xff]
    %v78 = vld [vmem:[#allocation5 + $0x40] sm:$0xff]
    %v79 = vld [vmem:[#allocation5 + $0x48] sm:$0xff]
    %v80 = vld [vmem:[#allocation5 + $0x50] sm:$0xff]
    %v81 = vld [vmem:[#allocation5 + $0x58] sm:$0xff]
    %v82 = vld [vmem:[#allocation5 + $0x60] sm:$0xff]
    %v83 = vld [vmem:[#allocation5 + $0x68] sm:$0xff]
    %v84 = vld [vmem:[#allocation5 + $0x70] sm:$0xff]
    %v85 = vld [vmem:[#allocation5 + $0x78] sm:$0xff]
    %v86 = vld [vmem:[%s2] sm:$0x1]
    %v88 = vlaneseq
    %v89 = vshrl.u32 %v88, 7
    %v90 = vsub.s32 0, %v89
    %v91 = vrot.slane %v86, %v90
    %v101 = vcombine.low %v62, %v63
    %v102 = vcombine.low %v64, %v65
    %v103 = vcombine.low %v66, %v67
    %v104 = vcombine.low %v68, %v69
    %109 = vmatprep.subr.mxu0 0.0
    %110 = vmatpush1.msra.mxu0 %v70
    %111 = vmatprep.subr.mxu0 0.0
    %112 = vmatpush1.msra.mxu0 %v71
    %113 = vmatprep.subr.mxu0 0.0
    %114 = vmatpush1.msra.mxu0 %v72
    %115 = vmatprep.subr.mxu0 0.0
    %116 = vmatpush1.msra.mxu0 %v73
    %117 = vmatprep.subr.mxu0 0.0
    %118 = vmatpush1.msra.mxu0 %v74
    %119 = vmatprep.subr.mxu0 0.0
    %120 = vmatpush1.msra.mxu0 %v75
    %121 = vmatprep.subr.mxu0 0.0
    %122 = vmatpush1.msra.mxu0 %v76
    %123 = vmatprep.subr.mxu0 0.0
    %124 = vmatpush1.msra.mxu0 %v77
    %125 = vmatprep.subr.mxu0 0.0
    %126 = vmatpush1.msra.mxu0 %v78
    %127 = vmatprep.subr.mxu0 0.0
    %128 = vmatpush1.msra.mxu0 %v79
    %129 = vmatprep.subr.mxu0 0.0
    %130 = vmatpush1.msra.mxu0 %v80
    %131 = vmatprep.subr.mxu0 0.0
    %132 = vmatpush1.msra.mxu0 %v81
    %133 = vmatprep.subr.mxu0 0.0
    %134 = vmatpush1.msra.mxu0 %v82
    %135 = vmatprep.subr.mxu0 0.0
    %136 = vmatpush1.msra.mxu0 %v83
    %137 = vmatprep.subr.mxu0 0.0
    %138 = vmatpush1.msra.mxu0 %v84
    %139 = vmatprep.subr.mxu0 0.0
    %140 = vmatpush1.msra.mxu0 %v85
    %141 = vmatprep.subr.mxu0 0.0
    %142 = vmatpush1.msra.mxu0 0.0
    %143 = vmatprep.subr.mxu0 0.0
    %144 = vmatpush1.msra.mxu0 0.0
    %145 = vmatprep.subr.mxu0 0.0
    %146 = vmatpush1.msra.mxu0 0.0
    %147 = vmatprep.subr.mxu0 0.0
    %148 = vmatpush1.msra.mxu0 0.0
    %149 = vmatprep.subr.mxu0 0.0
    %150 = vmatpush1.msra.mxu0 0.0
    %151 = vmatprep.subr.mxu0 0.0
    %152 = vmatpush1.msra.mxu0 0.0
    %153 = vmatprep.subr.mxu0 0.0
    %154 = vmatpush1.msra.mxu0 0.0
    %155 = vmatprep.subr.mxu0 0.0
    %156 = vmatpush1.msra.mxu0 0.0
    %157 = vmatprep.subr.mxu0 0.0
    %158 = vmatpush1.msra.mxu0 0.0
    %159 = vmatprep.subr.mxu0 0.0
    %160 = vmatpush1.msra.mxu0 0.0
    %161 = vmatprep.subr.mxu0 0.0
    %162 = vmatpush1.msra.mxu0 0.0
    %163 = vmatprep.subr.mxu0 0.0
    %164 = vmatpush1.msra.mxu0 0.0
    %165 = vmatprep.subr.mxu0 0.0
    %166 = vmatpush1.msra.mxu0 0.0
    %167 = vmatprep.subr.mxu0 0.0
    %168 = vmatpush1.msra.mxu0 0.0
    %169 = vmatprep.subr.mxu0 0.0
    %170 = vmatpush1.msra.mxu0 0.0
    %171 = vmatprep.subr.mxu0 0.0
    %172 = vmatpush1.msra.mxu0 0.0
    %173 = vmatprep.mubr.f32.mxu0 0.0
    %174 = vmatmul.mubr.f32.gmra.mrb[0].mxu0 %v101
    %v175 = vpop.f32.mrb[0].mxu0
    %v176 = vadd.f32 %v91, %v175
    %v177 = vpop.f32.mrb[0].mxu0
    %178 = vmatprep.mubr.f32.mxu0 0.0
    %179 = vmatmul.mubr.f32.gmra.mrb[0].mxu0 %v102
    %v180 = vpop.f32.mrb[0].mxu0
    %v181 = vadd.f32 %v91, %v180
    %v182 = vpop.f32.mrb[0].mxu0
    %183 = vmatprep.mubr.f32.mxu0 0.0
    %184 = vmatmul.mubr.f32.gmra.mrb[0].mxu0 %v103
    %v185 = vpop.f32.mrb[0].mxu0
    %v186 = vadd.f32 %v91, %v185
    %v187 = vpop.f32.mrb[0].mxu0
    %188 = vmatprep.mubr.f32.mxu0 0.0
    %189 = vmatmul.mubr.f32.gmra.mrb[0].mxu0 %v104
    %v190 = vpop.f32.mrb[0].mxu0
    %v191 = vadd.f32 %v91, %v190
    %v192 = vpop.f32.mrb[0].mxu0
    %193 = vdwg.mxu0
    %v194 = vmax.f32 %v176, 0.0
    %v195 = vmax.f32 %v181, 0.0
    %v196 = vmax.f32 %v186, 0.0
    %v197 = vmax.f32 %v191, 0.0
    %v198 = vld [vmem:[#allocation7] sm:$0xff]
    %v199 = vld [vmem:[#allocation7 + $0x8] sm:$0xff]
    %v200 = vld [vmem:[#allocation7 + $0x10] sm:$0xff]
    %v201 = vld [vmem:[#allocation7 + $0x18] sm:$0xff]
    %v202 = vld [vmem:[#allocation7 + $0x20] sm:$0xff]
    %v203 = vld [vmem:[#allocation7 + $0x28] sm:$0xff]
    %v204 = vld [vmem:[#allocation7 + $0x30] sm:$0xff]
    %v205 = vld [vmem:[#allocation7 + $0x38] sm:$0xff]
    %v206 = vld [vmem:[#allocation7 + $0x40] sm:$0xff]
    %v207 = vld [vmem:[#allocation7 + $0x48] sm:$0xff]
    %v208 = vld [vmem:[#allocation7 + $0x50] sm:$0xff]
    %v209 = vld [vmem:[#allocation7 + $0x58] sm:$0xff]
    %v210 = vld [vmem:[#allocation7 + $0x60] sm:$0xff]
    %v211 = vld [vmem:[#allocation7 + $0x68] sm:$0xff]
    %v212 = vld [vmem:[#allocation7 + $0x70] sm:$0xff]
    %v213 = vld [vmem:[#allocation7 + $0x78] sm:$0xff]
    %v214 = vld [vmem:[%s4] sm:$0x1]
    %v216 = vlaneseq
    %v217 = vshrl.u32 %v216, 7
    %v218 = vsub.s32 0, %v217
    %v219 = vrot.slane %v214, %v218
    %221 = vmatprep.subr.mxu0 0.0
    %222 = vmatpush1.msra.mxu0 %v198
    %223 = vmatprep.subr.mxu0 0.0
    %224 = vmatpush1.msra.mxu0 %v199
    %225 = vmatprep.subr.mxu0 0.0
    %226 = vmatpush1.msra.mxu0 %v200
    %227 = vmatprep.subr.mxu0 0.0
    %228 = vmatpush1.msra.mxu0 %v201
    %229 = vmatprep.subr.mxu0 0.0
    %230 = vmatpush1.msra.mxu0 %v202
    %231 = vmatprep.subr.mxu0 0.0
    %232 = vmatpush1.msra.mxu0 %v203
    %233 = vmatprep.subr.mxu0 0.0
    %234 = vmatpush1.msra.mxu0 %v204
    %235 = vmatprep.subr.mxu0 0.0
    %236 = vmatpush1.msra.mxu0 %v205
    %237 = vmatprep.subr.mxu0 0.0
    %238 = vmatpush1.msra.mxu0 %v206
    %239 = vmatprep.subr.mxu0 0.0
    %240 = vmatpush1.msra.mxu0 %v207
    %241 = vmatprep.subr.mxu0 0.0
    %242 = vmatpush1.msra.mxu0 %v208
    %243 = vmatprep.subr.mxu0 0.0
    %244 = vmatpush1.msra.mxu0 %v209
    %245 = vmatprep.subr.mxu0 0.0
    %246 = vmatpush1.msra.mxu0 %v210
    %247 = vmatprep.subr.mxu0 0.0
    %248 = vmatpush1.msra.mxu0 %v211
    %249 = vmatprep.subr.mxu0 0.0
    %250 = vmatpush1.msra.mxu0 %v212
    %251 = vmatprep.subr.mxu0 0.0
    %252 = vmatpush1.msra.mxu0 %v213
    %253 = vmatprep.subr.mxu0 0.0
    %254 = vmatpush1.msra.mxu0 0.0
    %255 = vmatprep.subr.mxu0 0.0
    %256 = vmatpush1.msra.mxu0 0.0
    %257 = vmatprep.subr.mxu0 0.0
    %258 = vmatpush1.msra.mxu0 0.0
    %259 = vmatprep.subr.mxu0 0.0
    %260 = vmatpush1.msra.mxu0 0.0
    %261 = vmatprep.subr.mxu0 0.0
    %262 = vmatpush1.msra.mxu0 0.0
    %263 = vmatprep.subr.mxu0 0.0
    %264 = vmatpush1.msra.mxu0 0.0
    %265 = vmatprep.subr.mxu0 0.0
    %266 = vmatpush1.msra.mxu0 0.0
    %267 = vmatprep.subr.mxu0 0.0
    %268 = vmatpush1.msra.mxu0 0.0
    %269 = vmatprep.subr.mxu0 0.0
    %270 = vmatpush1.msra.mxu0 0.0
    %271 = vmatprep.subr.mxu0 0.0
    %272 = vmatpush1.msra.mxu0 0.0
    %273 = vmatprep.subr.mxu0 0.0
    %274 = vmatpush1.msra.mxu0 0.0
    %275 = vmatprep.subr.mxu0 0.0
    %276 = vmatpush1.msra.mxu0 0.0
    %277 = vmatprep.subr.mxu0 0.0
    %278 = vmatpush1.msra.mxu0 0.0
    %279 = vmatprep.subr.mxu0 0.0
    %280 = vmatpush1.msra.mxu0 0.0
    %281 = vmatprep.subr.mxu0 0.0
    %282 = vmatpush1.msra.mxu0 0.0
    %283 = vmatprep.subr.mxu0 0.0
    %284 = vmatpush1.msra.mxu0 0.0
    %285 = vmatprep.mubr.f32.mxu0 0.0
    %286 = vmatmul.mubr.f32.gmra.mrb[0].mxu0 %v194
    %v287 = vpop.f32.mrb[0].mxu0
    %v288 = vadd.f32 %v219, %v287
    %v289 = vpop.f32.mrb[0].mxu0
    %290 = vmatprep.mubr.f32.mxu0 0.0
    %291 = vmatmul.mubr.f32.gmra.mrb[0].mxu0 %v195
    %v292 = vpop.f32.mrb[0].mxu0
    %v293 = vadd.f32 %v219, %v292
    %v294 = vpop.f32.mrb[0].mxu0
    %295 = vmatprep.mubr.f32.mxu0 0.0
    %296 = vmatmul.mubr.f32.gmra.mrb[0].mxu0 %v196
    %v297 = vpop.f32.mrb[0].mxu0
    %v298 = vadd.f32 %v219, %v297
    %v299 = vpop.f32.mrb[0].mxu0
    %300 = vmatprep.mubr.f32.mxu0 0.0
    %301 = vmatmul.mubr.f32.gmra.mrb[0].mxu0 %v197
    %v302 = vpop.f32.mrb[0].mxu0
    %v303 = vadd.f32 %v219, %v302
    %v304 = vpop.f32.mrb[0].mxu0
    %305 = vdwg.mxu0
    %v310 = vcombine.high %v288, %v288
    %v311 = vcombine.high %v293, %v293
    %v312 = vcombine.high %v298, %v298
    %v313 = vcombine.high %v303, %v303
    %vm318 = vcmask 1043456
    %v319 = vsel %vm318, %v288, -inf
    %v320 = vrot.slane %v319, 4
    %v321 = vmax.f32 %v319, %v320
    %v322 = vrot.slane %v321, 2
    %v323 = vmax.f32 %v321, %v322
    %v324 = vrot.slane %v323, 1
    %v325 = vmax.f32 %v323, %v324
    %v326 = vsel %vm318, %v310, -inf
    %v327 = vrot.slane %v326, 4
    %v328 = vmax.f32 %v326, %v327
    %v329 = vrot.slane %v328, 2
    %v330 = vmax.f32 %v328, %v329
    %v331 = vrot.slane %v330, 1
    %v332 = vmax.f32 %v330, %v331
    %v333 = vsel %vm318, %v293, -inf
    %v334 = vrot.slane %v333, 4
    %v335 = vmax.f32 %v333, %v334
    %v336 = vrot.slane %v335, 2
    %v337 = vmax.f32 %v335, %v336
    %v338 = vrot.slane %v337, 1
    %v339 = vmax.f32 %v337, %v338
    %v340 = vsel %vm318, %v311, -inf
    %v341 = vrot.slane %v340, 4
    %v342 = vmax.f32 %v340, %v341
    %v343 = vrot.slane %v342, 2
    %v344 = vmax.f32 %v342, %v343
    %v345 = vrot.slane %v344, 1
    %v346 = vmax.f32 %v344, %v345
    %v347 = vsel %vm318, %v298, -inf
    %v348 = vrot.slane %v347, 4
    %v349 = vmax.f32 %v347, %v348
    %v350 = vrot.slane %v349, 2
    %v351 = vmax.f32 %v349, %v350
    %v352 = vrot.slane %v351, 1
    %v353 = vmax.f32 %v351, %v352
    %v354 = vsel %vm318, %v312, -inf
    %v355 = vrot.slane %v354, 4
    %v356 = vmax.f32 %v354, %v355
    %v357 = vrot.slane %v356, 2
    %v358 = vmax.f32 %v356, %v357
    %v359 = vrot.slane %v358, 1
    %v360 = vmax.f32 %v358, %v359
    %v361 = vsel %vm318, %v303, -inf
    %v362 = vrot.slane %v361, 4
    %v363 = vmax.f32 %v361, %v362
    %v364 = vrot.slane %v363, 2
    %v365 = vmax.f32 %v363, %v364
    %v366 = vrot.slane %v365, 1
    %v367 = vmax.f32 %v365, %v366
    %v368 = vsel %vm318, %v313, -inf
    %v369 = vrot.slane %v368, 4
    %v370 = vmax.f32 %v368, %v369
    %v371 = vrot.slane %v370, 2
    %v372 = vmax.f32 %v370, %v371
    %v373 = vrot.slane %v372, 1
    %v374 = vmax.f32 %v372, %v373
    %v375 = vsub.f32 %v288, %v325
    %v376 = vsub.f32 %v310, %v332
    %v377 = vsub.f32 %v293, %v339
    %v378 = vsub.f32 %v311, %v346
    %v379 = vsub.f32 %v298, %v353
    %v380 = vsub.f32 %v312, %v360
    %v381 = vsub.f32 %v303, %v367
    %v382 = vsub.f32 %v313, %v374
    %v383 = vmul.f32 %v375, 1.442695
    %v384 = vpow.pop %v383
    %v385 = vmul.f32 %v376, 1.442695
    %v386 = vpow.pop %v385
    %v387 = vmul.f32 %v377, 1.442695
    %v388 = vpow.pop %v387
    %v389 = vmul.f32 %v378, 1.442695
    %v390 = vpow.pop %v389
    %v391 = vmul.f32 %v379, 1.442695
    %v392 = vpow.pop %v391
    %v393 = vmul.f32 %v380, 1.442695
    %v394 = vpow.pop %v393
    %v395 = vmul.f32 %v381, 1.442695
    %v396 = vpow.pop %v395
    %v397 = vmul.f32 %v382, 1.442695
    %v398 = vpow.pop %v397
    %v399 = vsel %vm318, %v384, 0.0
    %v400 = vrot.slane %v399, 4
    %v401 = vadd.f32 %v399, %v400
    %v402 = vrot.slane %v401, 2
    %v403 = vadd.f32 %v401, %v402
    %v404 = vrot.slane %v403, 1
    %v405 = vadd.f32 %v403, %v404
    %v406 = vsel %vm318, %v386, 0.0
    %v407 = vrot.slane %v406, 4
    %v408 = vadd.f32 %v406, %v407
    %v409 = vrot.slane %v408, 2
    %v410 = vadd.f32 %v408, %v409
    %v411 = vrot.slane %v410, 1
    %v412 = vadd.f32 %v410, %v411
    %v413 = vsel %vm318, %v388, 0.0
    %v414 = vrot.slane %v413, 4
    %v415 = vadd.f32 %v413, %v414
    %v416 = vrot.slane %v415, 2
    %v417 = vadd.f32 %v415, %v416
    %v418 = vrot.slane %v417, 1
    %v419 = vadd.f32 %v417, %v418
    %v420 = vsel %vm318, %v390, 0.0
    %v421 = vrot.slane %v420, 4
    %v422 = vadd.f32 %v420, %v421
    %v423 = vrot.slane %v422, 2
    %v424 = vadd.f32 %v422, %v423
    %v425 = vrot.slane %v424, 1
    %v426 = vadd.f32 %v424, %v425
    %v427 = vsel %vm318, %v392, 0.0
    %v428 = vrot.slane %v427, 4
    %v429 = vadd.f32 %v427, %v428
    %v430 = vrot.slane %v429, 2
    %v431 = vadd.f32 %v429, %v430
    %v432 = vrot.slane %v431, 1
    %v433 = vadd.f32 %v431, %v432
    %v434 = vsel %vm318, %v394, 0.0
    %v435 = vrot.slane %v434, 4
    %v436 = vadd.f32 %v434, %v435
    %v437 = vrot.slane %v436, 2
    %v438 = vadd.f32 %v436, %v437
    %v439 = vrot.slane %v438, 1
    %v440 = vadd.f32 %v438, %v439
    %v441 = vsel %vm318, %v396, 0.0
    %v442 = vrot.slane %v441, 4
    %v443 = vadd.f32 %v441, %v442
    %v444 = vrot.slane %v443, 2
    %v445 = vadd.f32 %v443, %v444
    %v446 = vrot.slane %v445, 1
    %v447 = vadd.f32 %v445, %v446
    %v448 = vsel %vm318, %v398, 0.0
    %v449 = vrot.slane %v448, 4
    %v450 = vadd.f32 %v448, %v449
    %v451 = vrot.slane %v450, 2
    %v452 = vadd.f32 %v450, %v451
    %v453 = vrot.slane %v452, 1
    %v454 = vadd.f32 %v452, %v453
    %v455 = vrcp.pop %v405
    %v456 = vrcp.pop %v412
    %v457 = vrcp.pop %v419
    %v458 = vrcp.pop %v426
    %v459 = vrcp.pop %v433
    %v460 = vrcp.pop %v440
    %v461 = vrcp.pop %v447
    %v462 = vrcp.pop %v454
    %v463 = vmul.f32 %v384, %v455
    %v464 = vmul.f32 %v386, %v456
    %v465 = vmul.f32 %v388, %v457
    %v466 = vmul.f32 %v390, %v458
    %v467 = vmul.f32 %v392, %v459
    %v468 = vmul.f32 %v394, %v460
    %v469 = vmul.f32 %v396, %v461
    %v470 = vmul.f32 %v398, %v462
    %v471 = vmul.f32 %v463, %v62
    %v472 = vmul.f32 %v464, %v63
    %v473 = vmul.f32 %v465, %v64
    %v474 = vmul.f32 %v466, %v65
    %v475 = vmul.f32 %v467, %v66
    %v476 = vmul.f32 %v468, %v67
    %v477 = vmul.f32 %v469, %v68
    %v478 = vmul.f32 %v470, %v69
    %v479 = vsel %vm318, %v471, 0.0
    %v480 = vrot.slane %v479, 4
    %v481 = vadd.f32 %v479, %v480
    %v482 = vrot.slane %v481, 2
    %v483 = vadd.f32 %v481, %v482
    %v484 = vrot.slane %v483, 1
    %v485 = vadd.f32 %v483, %v484
    %v486 = vsel %vm318, %v472, 0.0
    %v487 = vrot.slane %v486, 4
    %v488 = vadd.f32 %v486, %v487
    %v489 = vrot.slane %v488, 2
    %v490 = vadd.f32 %v488, %v489
    %v491 = vrot.slane %v490, 1
    %v492 = vadd.f32 %v490, %v491
    %v493 = vsel %vm318, %v473, 0.0
    %v494 = vrot.slane %v493, 4
    %v495 = vadd.f32 %v493, %v494
    %v496 = vrot.slane %v495, 2
    %v497 = vadd.f32 %v495, %v496
    %v498 = vrot.slane %v497, 1
    %v499 = vadd.f32 %v497, %v498
    %v500 = vsel %vm318, %v474, 0.0
    %v501 = vrot.slane %v500, 4
    %v502 = vadd.f32 %v500, %v501
    %v503 = vrot.slane %v502, 2
    %v504 = vadd.f32 %v502, %v503
    %v505 = vrot.slane %v504, 1
    %v506 = vadd.f32 %v504, %v505
    %v507 = vsel %vm318, %v475, 0.0
    %v508 = vrot.slane %v507, 4
    %v509 = vadd.f32 %v507, %v508
    %v510 = vrot.slane %v509, 2
    %v511 = vadd.f32 %v509, %v510
    %v512 = vrot.slane %v511, 1
    %v513 = vadd.f32 %v511, %v512
    %v514 = vsel %vm318, %v476, 0.0
    %v515 = vrot.slane %v514, 4
    %v516 = vadd.f32 %v514, %v515
    %v517 = vrot.slane %v516, 2
    %v518 = vadd.f32 %v516, %v517
    %v519 = vrot.slane %v518, 1
    %v520 = vadd.f32 %v518, %v519
    %v521 = vsel %vm318, %v477, 0.0
    %v522 = vrot.slane %v521, 4
    %v523 = vadd.f32 %v521, %v522
    %v524 = vrot.slane %v523, 2
    %v525 = vadd.f32 %v523, %v524
    %v526 = vrot.slane %v525, 1
    %v527 = vadd.f32 %v525, %v526
    %v528 = vsel %vm318, %v478, 0.0
    %v529 = vrot.slane %v528, 4
    %v530 = vadd.f32 %v528, %v529
    %v531 = vrot.slane %v530, 2
    %v532 = vadd.f32 %v530, %v531
    %v533 = vrot.slane %v532, 1
    %v534 = vadd.f32 %v532, %v533
    %vm543 = vcmask 1041409
    %v544 = vsel %vm543, %v492, %v485
    %vm545 = vcmask 1042434
    %v546 = vsel %vm545, %v499, %v544
    %vm547 = vcmask 1043459
    %v548 = vsel %vm547, %v506, %v546
    %vm549 = vcmask 1044484
    %v550 = vsel %vm549, %v513, %v548
    %vm551 = vcmask 1045509
    %v552 = vsel %vm551, %v520, %v550
    %vm553 = vcmask 1046534
    %v554 = vsel %vm553, %v527, %v552
    %vm555 = vcmask 1047559
    %v556 = vsel %vm555, %v534, %v554
    %558 = vst [vmem:[#allocation8] sm:$0xff] %v556
    // Predicated region
    $region34: #{tpu_custom_call.1} parent=1 // pred_check
      _
    $region35: #{tpu_custom_call.1} parent=1 // pred_check_branch
      %560 = sbr.rel (0) target = $region37
    $region36: #{tpu_custom_call.1} parent=1 // pred_region
      %s562 = ssub.s32 128, 128
      %563 = vsyncadd [#allocation4], %s562
      %s565 = sshll.u32 [#allocation8], 4
      %s566 = int_to_ptr.vmem [resolvable:$true] %s565
      %568 = dma.vmem_to_hbm [thread:$0]  %s566, 128, %s5, [#allocation4]
    $region37: #{tpu_custom_call.1} parent=1 // pred_fallthru
      _
    // Predicated region
    $region38: #{tpu_custom_call.1} parent=1 // pred_check
      _
    $region39: #{tpu_custom_call.1} parent=1 // pred_check_branch
      %570 = sbr.rel (0) target = $region41
    $region40: #{tpu_custom_call.1} parent=1 // pred_region
      %571 = dma.done [#allocation4], 128
    $region41: #{tpu_custom_call.1} parent=1 // pred_fallthru
      _
    %572 = vsyncpa [#allocation3], 1
    %573 = vsyncpa [#allocation6], 1
    %574 = vsyncpa [#allocation4], 1

</llo_original>
